<compile_context>
chip_gen: v6e
topology: v6e:2x2x1
jax: 0.10.0
libtpu: 0.0.40
codegen_flags: <defaults>
</compile_context>

<pallas_src>
import math
import functools

import jax
import jax.numpy as jnp
from jax.experimental import pallas as pl
from jax.experimental.pallas import tpu as pltpu


def _round_up(x, m):
    return (x + m - 1) // m * m


def _mm_bias_kernel(a_ref, b_ref, bias_ref, o_ref, acc_ref, *, use_bf16):
    """One (tm, tn) output tile of  A @ B + bias, accumulated over grid axis 2."""
    k = pl.program_id(2)

    @pl.when(k == 0)
    def _init():
        acc_ref[...] = jnp.zeros_like(acc_ref)

    a = a_ref[...]
    b = b_ref[...]
    if use_bf16:
        # bf16 MXU inputs, f32 accumulation.
        a = a.astype(jnp.bfloat16)
        b = b.astype(jnp.bfloat16)
    acc_ref[...] += jnp.dot(a, b, preferred_element_type=jnp.float32)

    @pl.when(k == pl.num_programs(2) - 1)
    def _finalize():
        # Bias added once per output tile (not per K step), lane-dense store.
        o_ref[...] = (acc_ref[...] + bias_ref[...]).astype(o_ref.dtype)


def _tiled_matmul_bias(a, b, bias2d, *, tm, tn, tk, use_bf16):
    """Tiled  a @ b + bias2d  with an f32 VMEM accumulator. Dims must divide."""
    m, kdim = a.shape
    _, ncol = b.shape
    grid = (m // tm, ncol // tn, kdim // tk)
    kernel = functools.partial(_mm_bias_kernel, use_bf16=use_bf16)
    return pl.pallas_call(
        kernel,
        out_shape=jax.ShapeDtypeStruct((m, ncol), jnp.float32),
        grid_spec=pltpu.PrefetchScalarGridSpec(
            num_scalar_prefetch=0,
            grid=grid,
            in_specs=[
                pl.BlockSpec((tm, tk), lambda i, j, k: (i, k)),   # A row/K tile
                pl.BlockSpec((tk, tn), lambda i, j, k: (k, j)),   # B K/col tile
                pl.BlockSpec((1, tn), lambda i, j, k: (0, j)),    # bias col tile
            ],
            out_specs=pl.BlockSpec((tm, tn), lambda i, j, k: (i, j)),
            scratch_shapes=[pltpu.VMEM((tm, tn), jnp.float32)],
        ),
        compiler_params=pltpu.CompilerParams(
            dimension_semantics=("parallel", "parallel", "arbitrary"),
            vmem_limit_bytes=32 * 1024 * 1024,
        ),
    )(a, b, bias2d)


@functools.partial(jax.jit, static_argnames=("use_bf16",))
def graph_convolution(x, weight, adj, bias=None, *, use_bf16=True):
    """Pallas GCN forward: adj @ (x @ weight) + bias."""
    n, f_in = x.shape
    f_out = weight.shape[1]

    # ---- tile selection (static at trace time) ----
    t_n = min(256, _round_up(n, 8))         # node tile: rows of adj/out AND adj contraction
    n_pad = _round_up(n, t_n)
    t_fi = min(512, _round_up(f_in, 8))     # contraction tile of x @ weight
    fi_pad = _round_up(f_in, t_fi)
    t_fo = min(256, _round_up(f_out, 128))  # lane-dense output-feature tile
    fo_pad = _round_up(f_out, t_fo)

    # ---- zero-pad to tile boundaries (zeros are mathematically inert here) ----
    x_p = jnp.pad(x.astype(jnp.float32), ((0, n_pad - n), (0, fi_pad - f_in)))
    w_p = jnp.pad(weight.astype(jnp.float32), ((0, fi_pad - f_in), (0, fo_pad - f_out)))
    adj_p = jnp.pad(adj.astype(jnp.float32), ((0, n_pad - n), (0, n_pad - n)))
    if bias is None:
        b_p = jnp.zeros((1, fo_pad), jnp.float32)
    else:
        b_p = jnp.pad(bias.astype(jnp.float32).reshape(1, f_out),
                      ((0, 0), (0, fo_pad - f_out)))
    zero_bias = jnp.zeros((1, fo_pad), jnp.float32)

    # support = x @ weight  -- computed exactly once (hoisted out of the row loop).
    support = _tiled_matmul_bias(x_p, w_p, zero_bias,
                                 tm=t_n, tn=t_fo, tk=t_fi, use_bf16=use_bf16)

    # output = adj @ support + bias  -- K-tiled accumulation over the node axis.
    out_p = _tiled_matmul_bias(adj_p, support, b_p,
                               tm=t_n, tn=t_fo, tk=t_n, use_bf16=use_bf16)

    return out_p[:n, :f_out]


def reference(x, weight, adj, bias):
    return adj @ (x @ weight) + bias[None, :]


if __name__ == "__main__":
    # Small shapes consistent with the module: N nodes, in_features -> out_features.
    N, F_IN, F_OUT = 128, 64, 32

    key = jax.random.PRNGKey(0)
    k_x, k_adj, k_w, k_b = jax.random.split(key, 4)

    # Deterministic parameter init matching reset_parameters():
    # uniform(-stdv, stdv) with stdv = 1/sqrt(out_features).
    stdv = 1.0 / math.sqrt(F_OUT)
    weight = jax.random.uniform(k_w, (F_IN, F_OUT), jnp.float32, -stdv, stdv)
    bias = jax.random.uniform(k_b, (F_OUT,), jnp.float32, -stdv, stdv)

    # Node features and a dense, row-normalized adjacency.
    x = jax.random.normal(k_x, (N, F_IN), jnp.float32)
    adj_raw = (jax.random.uniform(k_adj, (N, N), jnp.float32) < 0.1).astype(jnp.float32)
    adj = adj_raw + jnp.eye(N, dtype=jnp.float32)
    adj = adj / jnp.sum(adj, axis=1, keepdims=True)

    out = graph_convolution(x, weight, adj, bias)
    jax.block_until_ready(out)

    ref = reference(x, weight, adj, bias)
    assert out.shape == (N, F_OUT)
    # bf16 MXU inputs with f32 accumulation -> slightly looser tolerance than pure f32.
    assert jnp.allclose(out, ref, atol=3e-2, rtol=3e-2), "mismatch vs. reference"

    print("KERNEL_OK")
</pallas_src>

<mosaic_0001>
module attributes {stable_mosaic.version = 11 : i64} {
  func.func @_mm_bias_kernel(%arg0: i32, %arg1: i32, %arg2: i32, %arg3: memref<128x64xf32, #tpu.memory_space<vmem>>, %arg4: memref<64x128xf32, #tpu.memory_space<vmem>>, %arg5: memref<1x128xf32, #tpu.memory_space<vmem>>, %arg6: memref<128x128xf32, #tpu.memory_space<vmem>>, %arg7: memref<128x128xf32, #tpu.memory_space<vmem>>) attributes {dimension_semantics = [#tpu.dimension_semantics<parallel>, #tpu.dimension_semantics<parallel>, #tpu.dimension_semantics<arbitrary>], iteration_bounds = array<i64: 1, 1, 1>, scalar_prefetch = 0 : i64, scratch_operands = 1 : i64, tpu.core_type = #tpu.core_type<tc>, window_params = [{transform_indices = @transform_0, window_bounds = array<i64: 128, 64>}, {transform_indices = @transform_1, window_bounds = array<i64: 64, 128>}, {transform_indices = @transform_2, window_bounds = array<i64: 1, 128>}, {transform_indices = @transform_3, window_bounds = array<i64: 128, 128>}]} {
    %c0_i32 = arith.constant 0 : i32
    %0 = arith.cmpi eq, %arg2, %c0_i32 : i32
    %1 = arith.extui %0 : i1 to i32
    %c0_i32_0 = arith.constant 0 : i32
    %2 = arith.cmpi ne, %1, %c0_i32_0 : i32
    scf.if %2 {
      %cst_10 = arith.constant 0.000000e+00 : f32
      %14 = vector.broadcast %cst_10 : f32 to vector<128x128xf32>
      %c0_11 = arith.constant 0 : index
      %c0_12 = arith.constant 0 : index
      %15 = vector.load %arg7[%c0_11, %c0_12] : memref<128x128xf32, #tpu.memory_space<vmem>>, vector<128x128xf32>
      tpu.vector_store %arg7[%c0_11, %c0_12], %14 {strides = array<i32>} : memref<128x128xf32, #tpu.memory_space<vmem>>, vector<128x128xf32>,
    } else {
    }
    %c0 = arith.constant 0 : index
    %c0_1 = arith.constant 0 : index
    %3 = vector.load %arg3[%c0, %c0_1] : memref<128x64xf32, #tpu.memory_space<vmem>>, vector<128x64xf32>
    %c0_2 = arith.constant 0 : index
    %c0_3 = arith.constant 0 : index
    %4 = vector.load %arg4[%c0_2, %c0_3] : memref<64x128xf32, #tpu.memory_space<vmem>>, vector<64x128xf32>
    %5 = arith.truncf %3 : vector<128x64xf32> to vector<128x64xbf16>
    %6 = arith.truncf %4 : vector<64x128xf32> to vector<64x128xbf16>
    %c0_4 = arith.constant 0 : index
    %c0_5 = arith.constant 0 : index
    %7 = vector.load %arg7[%c0_4, %c0_5] : memref<128x128xf32, #tpu.memory_space<vmem>>, vector<128x128xf32>
    %cst = arith.constant dense<0.000000e+00> : vector<128x128xf32>
    %8 = tpu.matmul %5, %6, %cst {dimension_numbers = #tpu.dot_dimension_numbers<[1], [0], [0], [1], [0, 0, 1, 1], [], []>} : vector<128x64xbf16>, vector<64x128xbf16>, vector<128x128xf32> -> vector<128x128xf32>
    %9 = arith.addf %7, %8 : vector<128x128xf32>
    %c0_6 = arith.constant 0 : index
    %c0_7 = arith.constant 0 : index
    %10 = vector.load %arg7[%c0_6, %c0_7] : memref<128x128xf32, #tpu.memory_space<vmem>>, vector<128x128xf32>
    tpu.vector_store %arg7[%c0_6, %c0_7], %9 {strides = array<i32>} : memref<128x128xf32, #tpu.memory_space<vmem>>, vector<128x128xf32>,
    %c0_i32_8 = arith.constant 0 : i32
    %11 = arith.cmpi eq, %arg2, %c0_i32_8 : i32
    %12 = arith.extui %11 : i1 to i32
    %c0_i32_9 = arith.constant 0 : i32
    %13 = arith.cmpi ne, %12, %c0_i32_9 : i32
    scf.if %13 {
      %c0_10 = arith.constant 0 : index
      %c0_11 = arith.constant 0 : index
      %14 = vector.load %arg7[%c0_10, %c0_11] : memref<128x128xf32, #tpu.memory_space<vmem>>, vector<128x128xf32>
      %c0_12 = arith.constant 0 : index
      %c0_13 = arith.constant 0 : index
      %15 = vector.load %arg5[%c0_12, %c0_13] : memref<1x128xf32, #tpu.memory_space<vmem>>, vector<1x128xf32>
      %16 = vector.broadcast %15 : vector<1x128xf32> to vector<128x128xf32>
      %17 = arith.addf %14, %16 : vector<128x128xf32>
      %c0_14 = arith.constant 0 : index
      %c0_15 = arith.constant 0 : index
      %18 = vector.load %arg6[%c0_14, %c0_15] : memref<128x128xf32, #tpu.memory_space<vmem>>, vector<128x128xf32>
      tpu.vector_store %arg6[%c0_14, %c0_15], %17 {strides = array<i32>} : memref<128x128xf32, #tpu.memory_space<vmem>>, vector<128x128xf32>,
    } else {
    }
    return
  }
  func.func @transform_0(%arg0: i32, %arg1: i32, %arg2: i32) -> (i32, i32) {
    %c0_i32 = arith.constant 0 : i32
    return %arg0, %arg2 : i32, i32
  }
  func.func @transform_1(%arg0: i32, %arg1: i32, %arg2: i32) -> (i32, i32) {
    %c0_i32 = arith.constant 0 : i32
    return %arg2, %arg1 : i32, i32
  }
  func.func @transform_2(%arg0: i32, %arg1: i32, %arg2: i32) -> (i32, i32) {
    %c0_i32 = arith.constant 0 : i32
    %c0_i32_0 = arith.constant 0 : i32
    return %c0_i32, %arg1 : i32, i32
  }
  func.func @transform_3(%arg0: i32, %arg1: i32, %arg2: i32) -> (i32, i32) {
    %c0_i32 = arith.constant 0 : i32
    return %arg0, %arg1 : i32, i32
  }
}

module attributes {stable_mosaic.version = 11 : i64} {
  func.func @_mm_bias_kernel(%arg0: i32, %arg1: i32, %arg2: i32, %arg3: memref<128x128xf32, #tpu.memory_space<vmem>>, %arg4: memref<128x128xf32, #tpu.memory_space<vmem>>, %arg5: memref<1x128xf32, #tpu.memory_space<vmem>>, %arg6: memref<128x128xf32, #tpu.memory_space<vmem>>, %arg7: memref<128x128xf32, #tpu.memory_space<vmem>>) attributes {dimension_semantics = [#tpu.dimension_semantics<parallel>, #tpu.dimension_semantics<parallel>, #tpu.dimension_semantics<arbitrary>], iteration_bounds = array<i64: 1, 1, 1>, scalar_prefetch = 0 : i64, scratch_operands = 1 : i64, tpu.core_type = #tpu.core_type<tc>, window_params = [{transform_indices = @transform_0, window_bounds = array<i64: 128, 128>}, {transform_indices = @transform_1, window_bounds = array<i64: 128, 128>}, {transform_indices = @transform_2, window_bounds = array<i64: 1, 128>}, {transform_indices = @transform_3, window_bounds = array<i64: 128, 128>}]} {
    %c0_i32 = arith.constant 0 : i32
    %0 = arith.cmpi eq, %arg2, %c0_i32 : i32
    %1 = arith.extui %0 : i1 to i32
    %c0_i32_0 = arith.constant 0 : i32
    %2 = arith.cmpi ne, %1, %c0_i32_0 : i32
    scf.if %2 {
      %cst_10 = arith.constant 0.000000e+00 : f32
      %14 = vector.broadcast %cst_10 : f32 to vector<128x128xf32>
      %c0_11 = arith.constant 0 : index
      %c0_12 = arith.constant 0 : index
      %15 = vector.load %arg7[%c0_11, %c0_12] : memref<128x128xf32, #tpu.memory_space<vmem>>, vector<128x128xf32>
      tpu.vector_store %arg7[%c0_11, %c0_12], %14 {strides = array<i32>} : memref<128x128xf32, #tpu.memory_space<vmem>>, vector<128x128xf32>,
    } else {
    }
    %c0 = arith.constant 0 : index
    %c0_1 = arith.constant 0 : index
    %3 = vector.load %arg3[%c0, %c0_1] : memref<128x128xf32, #tpu.memory_space<vmem>>, vector<128x128xf32>
    %c0_2 = arith.constant 0 : index
    %c0_3 = arith.constant 0 : index
    %4 = vector.load %arg4[%c0_2, %c0_3] : memref<128x128xf32, #tpu.memory_space<vmem>>, vector<128x128xf32>
    %5 = arith.truncf %3 : vector<128x128xf32> to vector<128x128xbf16>
    %6 = arith.truncf %4 : vector<128x128xf32> to vector<128x128xbf16>
    %c0_4 = arith.constant 0 : index
    %c0_5 = arith.constant 0 : index
    %7 = vector.load %arg7[%c0_4, %c0_5] : memref<128x128xf32, #tpu.memory_space<vmem>>, vector<128x128xf32>
    %cst = arith.constant dense<0.000000e+00> : vector<128x128xf32>
    %8 = tpu.matmul %5, %6, %cst {dimension_numbers = #tpu.dot_dimension_numbers<[1], [0], [0], [1], [0, 0, 1, 1], [], []>} : vector<128x128xbf16>, vector<128x128xbf16>, vector<128x128xf32> -> vector<128x128xf32>
    %9 = arith.addf %7, %8 : vector<128x128xf32>
    %c0_6 = arith.constant 0 : index
    %c0_7 = arith.constant 0 : index
    %10 = vector.load %arg7[%c0_6, %c0_7] : memref<128x128xf32, #tpu.memory_space<vmem>>, vector<128x128xf32>
    tpu.vector_store %arg7[%c0_6, %c0_7], %9 {strides = array<i32>} : memref<128x128xf32, #tpu.memory_space<vmem>>, vector<128x128xf32>,
    %c0_i32_8 = arith.constant 0 : i32
    %11 = arith.cmpi eq, %arg2, %c0_i32_8 : i32
    %12 = arith.extui %11 : i1 to i32
    %c0_i32_9 = arith.constant 0 : i32
    %13 = arith.cmpi ne, %12, %c0_i32_9 : i32
    scf.if %13 {
      %c0_10 = arith.constant 0 : index
      %c0_11 = arith.constant 0 : index
      %14 = vector.load %arg7[%c0_10, %c0_11] : memref<128x128xf32, #tpu.memory_space<vmem>>, vector<128x128xf32>
      %c0_12 = arith.constant 0 : index
      %c0_13 = arith.constant 0 : index
      %15 = vector.load %arg5[%c0_12, %c0_13] : memref<1x128xf32, #tpu.memory_space<vmem>>, vector<1x128xf32>
      %16 = vector.broadcast %15 : vector<1x128xf32> to vector<128x128xf32>
      %17 = arith.addf %14, %16 : vector<128x128xf32>
      %c0_14 = arith.constant 0 : index
      %c0_15 = arith.constant 0 : index
      %18 = vector.load %arg6[%c0_14, %c0_15] : memref<128x128xf32, #tpu.memory_space<vmem>>, vector<128x128xf32>
      tpu.vector_store %arg6[%c0_14, %c0_15], %17 {strides = array<i32>} : memref<128x128xf32, #tpu.memory_space<vmem>>, vector<128x128xf32>,
    } else {
    }
    return
  }
  func.func @transform_0(%arg0: i32, %arg1: i32, %arg2: i32) -> (i32, i32) {
    %c0_i32 = arith.constant 0 : i32
    return %arg0, %arg2 : i32, i32
  }
  func.func @transform_1(%arg0: i32, %arg1: i32, %arg2: i32) -> (i32, i32) {
    %c0_i32 = arith.constant 0 : i32
    return %arg2, %arg1 : i32, i32
  }
  func.func @transform_2(%arg0: i32, %arg1: i32, %arg2: i32) -> (i32, i32) {
    %c0_i32 = arith.constant 0 : i32
    %c0_i32_0 = arith.constant 0 : i32
    return %c0_i32, %arg1 : i32, i32
  }
  func.func @transform_3(%arg0: i32, %arg1: i32, %arg2: i32) -> (i32, i32) {
    %c0_i32 = arith.constant 0 : i32
    return %arg0, %arg1 : i32, i32
  }
}

</mosaic_0001>

<llo_original>
// kernel: graph_convolution.3
$region0: #{graph_convolution.3}
  #allocation0 [shape = 'u32[]', space=smem, size = 0x4, offset = 0x4, fixed_abs, tag = 'smem constant byte address 0x4 - core index']
  #allocation1 [shape = 'u32[144,128]{1,0:T(1,128)}', space=vmem, size = 0x12000, scoped, tag = 'internal scratch']
  #allocation2 [shape = 'f32[128,128]{1,0:T(8,128)}', space=vmem, size = 0x10000, scoped, tag = 'scratch operand']
  %s0 = inlined_call_operand.vmem [shape: f32[128,128], index: 0, kind: input, shape index: {}]
  %s1 = inlined_call_operand.vmem [shape: f32[128,128], index: 1, kind: input, shape index: {}]
  %s2 = inlined_call_operand.vmem [shape: f32[1,128], index: 2, kind: input, shape index: {}]
  %s3 = inlined_call_operand.vmem [shape: f32[128,128], index: 3, kind: output, shape index: {}]
  %s4 = sld [smem:[#allocation0]]
  $region30: #{graph_convolution.3} parent=0
    _
  %s6 = ssub.s32 1, %s4
  %s7 = scalar_select 0, %s6, %s4
  // Predicated region
  $region2: #{graph_convolution.3} parent=0 // pred_check
    _
  $region3: #{graph_convolution.3} parent=0 // pred_check_branch
    %9 = sbr.rel (0) target = $region5
  $region4: #{graph_convolution.3} parent=0 // pred_region
    _
  $region5: #{graph_convolution.3} parent=0 // pred_fallthru
    _
  // Predicated region
  $region6: #{graph_convolution.3} parent=0 // pred_check
    _
  $region7: #{graph_convolution.3} parent=0 // pred_check_branch
    %11 = sbr.rel (0) target = $region9
  $region8: #{graph_convolution.3} parent=0 // pred_region
    _
  $region9: #{graph_convolution.3} parent=0 // pred_fallthru
    _
  // Predicated region
  $region10: #{graph_convolution.3} parent=0 // pred_check
    _
  $region11: #{graph_convolution.3} parent=0 // pred_check_branch
    %13 = sbr.rel (0) target = $region13
  $region12: #{graph_convolution.3} parent=0 // pred_region
    _
  $region13: #{graph_convolution.3} parent=0 // pred_fallthru
    _
  %p15 = scmp.eq.s32.totalorder 0, 0
  // Predicated region
  $region14: #{graph_convolution.3} parent=0 // pred_check
    %p16 = pneg %p15
  $region15: #{graph_convolution.3} parent=0 // pred_check_branch
    %18 = sbr.rel (%p16) target = $region17
  $region16: #{graph_convolution.3} parent=0 // pred_region
    %19 = vst [vmem:[#allocation2] sm:$0xff] 0.0
    %20 = vst [vmem:[#allocation2 + $0x8] sm:$0xff] 0.0
    %21 = vst [vmem:[#allocation2 + $0x10] sm:$0xff] 0.0
    %22 = vst [vmem:[#allocation2 + $0x18] sm:$0xff] 0.0
    %23 = vst [vmem:[#allocation2 + $0x20] sm:$0xff] 0.0
    %24 = vst [vmem:[#allocation2 + $0x28] sm:$0xff] 0.0
    %25 = vst [vmem:[#allocation2 + $0x30] sm:$0xff] 0.0
    %26 = vst [vmem:[#allocation2 + $0x38] sm:$0xff] 0.0
    %27 = vst [vmem:[#allocation2 + $0x40] sm:$0xff] 0.0
    %28 = vst [vmem:[#allocation2 + $0x48] sm:$0xff] 0.0
    %29 = vst [vmem:[#allocation2 + $0x50] sm:$0xff] 0.0
    %30 = vst [vmem:[#allocation2 + $0x58] sm:$0xff] 0.0
    %31 = vst [vmem:[#allocation2 + $0x60] sm:$0xff] 0.0
    %32 = vst [vmem:[#allocation2 + $0x68] sm:$0xff] 0.0
    %33 = vst [vmem:[#allocation2 + $0x70] sm:$0xff] 0.0
    %34 = vst [vmem:[#allocation2 + $0x78] sm:$0xff] 0.0
  $region17: #{graph_convolution.3} parent=0 // pred_fallthru
    _
  %v35 = vld [vmem:[%s0] sm:$0xff]
  %v36 = vld [vmem:[%s0 + $0x8] sm:$0xff]
  %v37 = vld [vmem:[%s0 + $0x10] sm:$0xff]
  %v38 = vld [vmem:[%s0 + $0x18] sm:$0xff]
  %v39 = vld [vmem:[%s0 + $0x20] sm:$0xff]
  %v40 = vld [vmem:[%s0 + $0x28] sm:$0xff]
  %v41 = vld [vmem:[%s0 + $0x30] sm:$0xff]
  %v42 = vld [vmem:[%s0 + $0x38] sm:$0xff]
  %v43 = vld [vmem:[%s0 + $0x40] sm:$0xff]
  %v44 = vld [vmem:[%s0 + $0x48] sm:$0xff]
  %v45 = vld [vmem:[%s0 + $0x50] sm:$0xff]
  %v46 = vld [vmem:[%s0 + $0x58] sm:$0xff]
  %v47 = vld [vmem:[%s0 + $0x60] sm:$0xff]
  %v48 = vld [vmem:[%s0 + $0x68] sm:$0xff]
  %v49 = vld [vmem:[%s0 + $0x70] sm:$0xff]
  %v50 = vld [vmem:[%s0 + $0x78] sm:$0xff]
  %v51 = vld [vmem:[%s1] sm:$0xff]
  %v52 = vld [vmem:[%s1 + $0x8] sm:$0xff]
  %v53 = vld [vmem:[%s1 + $0x10] sm:$0xff]
  %v54 = vld [vmem:[%s1 + $0x18] sm:$0xff]
  %v55 = vld [vmem:[%s1 + $0x20] sm:$0xff]
  %v56 = vld [vmem:[%s1 + $0x28] sm:$0xff]
  %v57 = vld [vmem:[%s1 + $0x30] sm:$0xff]
  %v58 = vld [vmem:[%s1 + $0x38] sm:$0xff]
  %v59 = vld [vmem:[%s1 + $0x40] sm:$0xff]
  %v60 = vld [vmem:[%s1 + $0x48] sm:$0xff]
  %v61 = vld [vmem:[%s1 + $0x50] sm:$0xff]
  %v62 = vld [vmem:[%s1 + $0x58] sm:$0xff]
  %v63 = vld [vmem:[%s1 + $0x60] sm:$0xff]
  %v64 = vld [vmem:[%s1 + $0x68] sm:$0xff]
  %v65 = vld [vmem:[%s1 + $0x70] sm:$0xff]
  %v66 = vld [vmem:[%s1 + $0x78] sm:$0xff]
  %v67 = vpack.c.bf16 %v36, %v35
  %v68 = vpack.c.bf16 %v38, %v37
  %v69 = vpack.c.bf16 %v40, %v39
  %v70 = vpack.c.bf16 %v42, %v41
  %v71 = vpack.c.bf16 %v44, %v43
  %v72 = vpack.c.bf16 %v46, %v45
  %v73 = vpack.c.bf16 %v48, %v47
  %v74 = vpack.c.bf16 %v50, %v49
  %v75 = vpack.c.bf16 %v52, %v51
  %v76 = vpack.c.bf16 %v54, %v53
  %v77 = vpack.c.bf16 %v56, %v55
  %v78 = vpack.c.bf16 %v58, %v57
  %v79 = vpack.c.bf16 %v60, %v59
  %v80 = vpack.c.bf16 %v62, %v61
  %v81 = vpack.c.bf16 %v64, %v63
  %v82 = vpack.c.bf16 %v66, %v65
  %v83 = vld [vmem:[#allocation2] sm:$0xff]
  %v84 = vld [vmem:[#allocation2 + $0x8] sm:$0xff]
  %v85 = vld [vmem:[#allocation2 + $0x10] sm:$0xff]
  %v86 = vld [vmem:[#allocation2 + $0x18] sm:$0xff]
  %v87 = vld [vmem:[#allocation2 + $0x20] sm:$0xff]
  %v88 = vld [vmem:[#allocation2 + $0x28] sm:$0xff]
  %v89 = vld [vmem:[#allocation2 + $0x30] sm:$0xff]
  %v90 = vld [vmem:[#allocation2 + $0x38] sm:$0xff]
  %v91 = vld [vmem:[#allocation2 + $0x40] sm:$0xff]
  %v92 = vld [vmem:[#allocation2 + $0x48] sm:$0xff]
  %v93 = vld [vmem:[#allocation2 + $0x50] sm:$0xff]
  %v94 = vld [vmem:[#allocation2 + $0x58] sm:$0xff]
  %v95 = vld [vmem:[#allocation2 + $0x60] sm:$0xff]
  %v96 = vld [vmem:[#allocation2 + $0x68] sm:$0xff]
  %v97 = vld [vmem:[#allocation2 + $0x70] sm:$0xff]
  %v98 = vld [vmem:[#allocation2 + $0x78] sm:$0xff]
  %99 = vmatprep.subr.bf16.mxu0 0
  %100 = vmatpush1.bf16.msra.mxu0 %v82
  %101 = vmatprep.subr.bf16.mxu0 0
  %102 = vmatpush1.bf16.msra.mxu0 %v81
  %103 = vmatprep.subr.bf16.mxu0 0
  %104 = vmatpush1.bf16.msra.mxu0 %v80
  %105 = vmatprep.subr.bf16.mxu0 0
  %106 = vmatpush1.bf16.msra.mxu0 %v79
  %107 = vmatprep.subr.bf16.mxu0 0
  %108 = vmatpush1.bf16.msra.mxu0 %v78
  %109 = vmatprep.subr.bf16.mxu0 0
  %110 = vmatpush1.bf16.msra.mxu0 %v77
  %111 = vmatprep.subr.bf16.mxu0 0
  %112 = vmatpush1.bf16.msra.mxu0 %v76
  %113 = vmatprep.subr.bf16.mxu0 0
  %114 = vmatpush1.bf16.msra.mxu0 %v75
  %115 = vmatprep.subr.bf16.mxu0 0
  %116 = vmatpush2.bf16.msra.mxu0 0
  %117 = vmatprep.subr.bf16.mxu0 0
  %118 = vmatpush2.bf16.msra.mxu0 0
  %119 = vmatprep.subr.bf16.mxu0 0
  %120 = vmatpush2.bf16.msra.mxu0 0
  %121 = vmatprep.subr.bf16.mxu0 0
  %122 = vmatpush2.bf16.msra.mxu0 0
  %123 = vmatprep.subr.bf16.mxu0 0
  %124 = vmatpush2.bf16.msra.mxu0 0
  %125 = vmatprep.subr.bf16.mxu0 0
  %126 = vmatpush2.bf16.msra.mxu0 0
  %127 = vmatprep.subr.bf16.mxu0 0
  %128 = vmatpush2.bf16.msra.mxu0 0
  %129 = vmatprep.subr.bf16.mxu0 0
  %130 = vmatpush2.bf16.msra.mxu0 0
  %131 = vmatprep.mubr.bf16.mxu0 0
  %132 = vmatmul.mubr.bf16.gmra.mxu0 %v67
  %v133 = vpop.f32.mrf.mxu0
  %v134 = vadd.f32 0.0, %v133
  %v135 = vpop.f32.mrf.mxu0
  %v136 = vpop.f32.mrf.mxu0
  %v137 = vadd.f32 0.0, %v136
  %v138 = vpop.f32.mrf.mxu0
  %139 = vmatprep.mubr.bf16.mxu0 0
  %140 = vmatmul.mubr.bf16.gmra.mxu0 %v68
  %v141 = vpop.f32.mrf.mxu0
  %v142 = vadd.f32 0.0, %v141
  %v143 = vpop.f32.mrf.mxu0
  %v144 = vpop.f32.mrf.mxu0
  %v145 = vadd.f32 0.0, %v144
  %v146 = vpop.f32.mrf.mxu0
  %147 = vmatprep.mubr.bf16.mxu0 0
  %148 = vmatmul.mubr.bf16.gmra.mxu0 %v69
  %v149 = vpop.f32.mrf.mxu0
  %v150 = vadd.f32 0.0, %v149
  %v151 = vpop.f32.mrf.mxu0
  %v152 = vpop.f32.mrf.mxu0
  %v153 = vadd.f32 0.0, %v152
  %v154 = vpop.f32.mrf.mxu0
  %155 = vmatprep.mubr.bf16.mxu0 0
  %156 = vmatmul.mubr.bf16.gmra.mxu0 %v70
  %v157 = vpop.f32.mrf.mxu0
  %v158 = vadd.f32 0.0, %v157
  %v159 = vpop.f32.mrf.mxu0
  %v160 = vpop.f32.mrf.mxu0
  %v161 = vadd.f32 0.0, %v160
  %v162 = vpop.f32.mrf.mxu0
  %163 = vmatprep.mubr.bf16.mxu0 0
  %164 = vmatmul.mubr.bf16.gmra.mxu0 %v71
  %v165 = vpop.f32.mrf.mxu0
  %v166 = vadd.f32 0.0, %v165
  %v167 = vpop.f32.mrf.mxu0
  %v168 = vpop.f32.mrf.mxu0
  %v169 = vadd.f32 0.0, %v168
  %v170 = vpop.f32.mrf.mxu0
  %171 = vmatprep.mubr.bf16.mxu0 0
  %172 = vmatmul.mubr.bf16.gmra.mxu0 %v72
  %v173 = vpop.f32.mrf.mxu0
  %v174 = vadd.f32 0.0, %v173
  %v175 = vpop.f32.mrf.mxu0
  %v176 = vpop.f32.mrf.mxu0
  %v177 = vadd.f32 0.0, %v176
  %v178 = vpop.f32.mrf.mxu0
  %179 = vmatprep.mubr.bf16.mxu0 0
  %180 = vmatmul.mubr.bf16.gmra.mxu0 %v73
  %v181 = vpop.f32.mrf.mxu0
  %v182 = vadd.f32 0.0, %v181
  %v183 = vpop.f32.mrf.mxu0
  %v184 = vpop.f32.mrf.mxu0
  %v185 = vadd.f32 0.0, %v184
  %v186 = vpop.f32.mrf.mxu0
  %187 = vmatprep.mubr.bf16.mxu0 0
  %188 = vmatmul.mubr.bf16.gmra.mxu0 %v74
  %v189 = vpop.f32.mrf.mxu0
  %v190 = vadd.f32 0.0, %v189
  %v191 = vpop.f32.mrf.mxu0
  %v192 = vpop.f32.mrf.mxu0
  %v193 = vadd.f32 0.0, %v192
  %v194 = vpop.f32.mrf.mxu0
  %195 = vdwg.mxu0
  %v196 = vadd.f32 %v83, %v134
  %v197 = vadd.f32 %v84, %v137
  %v198 = vadd.f32 %v85, %v142
  %v199 = vadd.f32 %v86, %v145
  %v200 = vadd.f32 %v87, %v150
  %v201 = vadd.f32 %v88, %v153
  %v202 = vadd.f32 %v89, %v158
  %v203 = vadd.f32 %v90, %v161
  %v204 = vadd.f32 %v91, %v166
  %v205 = vadd.f32 %v92, %v169
  %v206 = vadd.f32 %v93, %v174
  %v207 = vadd.f32 %v94, %v177
  %v208 = vadd.f32 %v95, %v182
  %v209 = vadd.f32 %v96, %v185
  %v210 = vadd.f32 %v97, %v190
  %v211 = vadd.f32 %v98, %v193
  %212 = vst [vmem:[#allocation2] sm:$0xff] %v196
  %213 = vst [vmem:[#allocation2 + $0x8] sm:$0xff] %v197
  %214 = vst [vmem:[#allocation2 + $0x10] sm:$0xff] %v198
  %215 = vst [vmem:[#allocation2 + $0x18] sm:$0xff] %v199
  %216 = vst [vmem:[#allocation2 + $0x20] sm:$0xff] %v200
  %217 = vst [vmem:[#allocation2 + $0x28] sm:$0xff] %v201
  %218 = vst [vmem:[#allocation2 + $0x30] sm:$0xff] %v202
  %219 = vst [vmem:[#allocation2 + $0x38] sm:$0xff] %v203
  %220 = vst [vmem:[#allocation2 + $0x40] sm:$0xff] %v204
  %221 = vst [vmem:[#allocation2 + $0x48] sm:$0xff] %v205
  %222 = vst [vmem:[#allocation2 + $0x50] sm:$0xff] %v206
  %223 = vst [vmem:[#allocation2 + $0x58] sm:$0xff] %v207
  %224 = vst [vmem:[#allocation2 + $0x60] sm:$0xff] %v208
  %225 = vst [vmem:[#allocation2 + $0x68] sm:$0xff] %v209
  %226 = vst [vmem:[#allocation2 + $0x70] sm:$0xff] %v210
  %227 = vst [vmem:[#allocation2 + $0x78] sm:$0xff] %v211
  // Predicated region
  $region18: #{graph_convolution.3} parent=0 // pred_check
    %p228 = pneg %p15
  $region19: #{graph_convolution.3} parent=0 // pred_check_branch
    %230 = sbr.rel (%p228) target = $region21
  $region20: #{graph_convolution.3} parent=0 // pred_region
    %v231 = vld [vmem:[#allocation2] sm:$0xff]
    %v232 = vld [vmem:[#allocation2 + $0x8] sm:$0xff]
    %v233 = vld [vmem:[#allocation2 + $0x10] sm:$0xff]
    %v234 = vld [vmem:[#allocation2 + $0x18] sm:$0xff]
    %v235 = vld [vmem:[#allocation2 + $0x20] sm:$0xff]
    %v236 = vld [vmem:[#allocation2 + $0x28] sm:$0xff]
    %v237 = vld [vmem:[#allocation2 + $0x30] sm:$0xff]
    %v238 = vld [vmem:[#allocation2 + $0x38] sm:$0xff]
    %v239 = vld [vmem:[#allocation2 + $0x40] sm:$0xff]
    %v240 = vld [vmem:[#allocation2 + $0x48] sm:$0xff]
    %v241 = vld [vmem:[#allocation2 + $0x50] sm:$0xff]
    %v242 = vld [vmem:[#allocation2 + $0x58] sm:$0xff]
    %v243 = vld [vmem:[#allocation2 + $0x60] sm:$0xff]
    %v244 = vld [vmem:[#allocation2 + $0x68] sm:$0xff]
    %v245 = vld [vmem:[#allocation2 + $0x70] sm:$0xff]
    %v246 = vld [vmem:[#allocation2 + $0x78] sm:$0xff]
    %v247 = vld [vmem:[%s2] sm:$0x1]
    %v249 = vlaneseq
    %v250 = vshrl.u32 %v249, 7
    %v251 = vsub.s32 0, %v250
    %v252 = vrot.slane %v247, %v251
    %v254 = vadd.f32 %v231, %v252
    %v255 = vadd.f32 %v232, %v252
    %v256 = vadd.f32 %v233, %v252
    %v257 = vadd.f32 %v234, %v252
    %v258 = vadd.f32 %v235, %v252
    %v259 = vadd.f32 %v236, %v252
    %v260 = vadd.f32 %v237, %v252
    %v261 = vadd.f32 %v238, %v252
    %v262 = vadd.f32 %v239, %v252
    %v263 = vadd.f32 %v240, %v252
    %v264 = vadd.f32 %v241, %v252
    %v265 = vadd.f32 %v242, %v252
    %v266 = vadd.f32 %v243, %v252
    %v267 = vadd.f32 %v244, %v252
    %v268 = vadd.f32 %v245, %v252
    %v269 = vadd.f32 %v246, %v252
    %270 = vst [vmem:[%s3] sm:$0xff] %v254
    %271 = vst [vmem:[%s3 + $0x8] sm:$0xff] %v255
    %272 = vst [vmem:[%s3 + $0x10] sm:$0xff] %v256
    %273 = vst [vmem:[%s3 + $0x18] sm:$0xff] %v257
    %274 = vst [vmem:[%s3 + $0x20] sm:$0xff] %v258
    %275 = vst [vmem:[%s3 + $0x28] sm:$0xff] %v259
    %276 = vst [vmem:[%s3 + $0x30] sm:$0xff] %v260
    %277 = vst [vmem:[%s3 + $0x38] sm:$0xff] %v261
    %278 = vst [vmem:[%s3 + $0x40] sm:$0xff] %v262
    %279 = vst [vmem:[%s3 + $0x48] sm:$0xff] %v263
    %280 = vst [vmem:[%s3 + $0x50] sm:$0xff] %v264
    %281 = vst [vmem:[%s3 + $0x58] sm:$0xff] %v265
    %282 = vst [vmem:[%s3 + $0x60] sm:$0xff] %v266
    %283 = vst [vmem:[%s3 + $0x68] sm:$0xff] %v267
    %284 = vst [vmem:[%s3 + $0x70] sm:$0xff] %v268
    %285 = vst [vmem:[%s3 + $0x78] sm:$0xff] %v269
  $region21: #{graph_convolution.3} parent=0 // pred_fallthru
    _
  // Predicated region
  $region22: #{graph_convolution.3} parent=0 // pred_check
    _
  $region23: #{graph_convolution.3} parent=0 // pred_check_branch
    %287 = sbr.rel (0) target = $region25
  $region24: #{graph_convolution.3} parent=0 // pred_region
    _
  $region25: #{graph_convolution.3} parent=0 // pred_fallthru
    _
  // Predicated region
  $region26: #{graph_convolution.3} parent=0 // pred_check
    _
  $region27: #{graph_convolution.3} parent=0 // pred_check_branch
    %289 = sbr.rel (0) target = $region29
  $region28: #{graph_convolution.3} parent=0 // pred_region
    _
  $region29: #{graph_convolution.3} parent=0 // pred_fallthru
    _

// kernel: graph_convolution.2
$region0: #{graph_convolution.2}
  #allocation0 [shape = 'u32[]', space=smem, size = 0x4, offset = 0x4, fixed_abs, tag = 'smem constant byte address 0x4 - core index']
  #allocation1 [shape = 'u32[144,128]{1,0:T(1,128)}', space=vmem, size = 0x12000, scoped, tag = 'internal scratch']
  #allocation2 [shape = 'f32[128,128]{1,0:T(8,128)}', space=vmem, size = 0x10000, scoped, tag = 'scratch operand']
  %s0 = inlined_call_operand.vmem [shape: f32[128,64], index: 0, kind: input, shape index: {}]
  %s1 = inlined_call_operand.vmem [shape: f32[64,128], index: 1, kind: input, shape index: {}]
  %s2 = inlined_call_operand.vmem [shape: f32[1,128], index: 2, kind: input, shape index: {}]
  %s3 = inlined_call_operand.vmem [shape: f32[128,128], index: 3, kind: output, shape index: {}]
  %s4 = sld [smem:[#allocation0]]
  $region30: #{graph_convolution.2} parent=0
    _
  %s6 = ssub.s32 1, %s4
  %s7 = scalar_select 0, %s6, %s4
  // Predicated region
  $region2: #{graph_convolution.2} parent=0 // pred_check
    _
  $region3: #{graph_convolution.2} parent=0 // pred_check_branch
    %9 = sbr.rel (0) target = $region5
  $region4: #{graph_convolution.2} parent=0 // pred_region
    _
  $region5: #{graph_convolution.2} parent=0 // pred_fallthru
    _
  // Predicated region
  $region6: #{graph_convolution.2} parent=0 // pred_check
    _
  $region7: #{graph_convolution.2} parent=0 // pred_check_branch
    %11 = sbr.rel (0) target = $region9
  $region8: #{graph_convolution.2} parent=0 // pred_region
    _
  $region9: #{graph_convolution.2} parent=0 // pred_fallthru
    _
  // Predicated region
  $region10: #{graph_convolution.2} parent=0 // pred_check
    _
  $region11: #{graph_convolution.2} parent=0 // pred_check_branch
    %13 = sbr.rel (0) target = $region13
  $region12: #{graph_convolution.2} parent=0 // pred_region
    _
  $region13: #{graph_convolution.2} parent=0 // pred_fallthru
    _
  %p15 = scmp.eq.s32.totalorder 0, 0
  // Predicated region
  $region14: #{graph_convolution.2} parent=0 // pred_check
    %p16 = pneg %p15
  $region15: #{graph_convolution.2} parent=0 // pred_check_branch
    %18 = sbr.rel (%p16) target = $region17
  $region16: #{graph_convolution.2} parent=0 // pred_region
    %19 = vst [vmem:[#allocation2] sm:$0xff] 0.0
    %20 = vst [vmem:[#allocation2 + $0x8] sm:$0xff] 0.0
    %21 = vst [vmem:[#allocation2 + $0x10] sm:$0xff] 0.0
    %22 = vst [vmem:[#allocation2 + $0x18] sm:$0xff] 0.0
    %23 = vst [vmem:[#allocation2 + $0x20] sm:$0xff] 0.0
    %24 = vst [vmem:[#allocation2 + $0x28] sm:$0xff] 0.0
    %25 = vst [vmem:[#allocation2 + $0x30] sm:$0xff] 0.0
    %26 = vst [vmem:[#allocation2 + $0x38] sm:$0xff] 0.0
    %27 = vst [vmem:[#allocation2 + $0x40] sm:$0xff] 0.0
    %28 = vst [vmem:[#allocation2 + $0x48] sm:$0xff] 0.0
    %29 = vst [vmem:[#allocation2 + $0x50] sm:$0xff] 0.0
    %30 = vst [vmem:[#allocation2 + $0x58] sm:$0xff] 0.0
    %31 = vst [vmem:[#allocation2 + $0x60] sm:$0xff] 0.0
    %32 = vst [vmem:[#allocation2 + $0x68] sm:$0xff] 0.0
    %33 = vst [vmem:[#allocation2 + $0x70] sm:$0xff] 0.0
    %34 = vst [vmem:[#allocation2 + $0x78] sm:$0xff] 0.0
  $region17: #{graph_convolution.2} parent=0 // pred_fallthru
    _
  %v35 = vld [vmem:[%s0] sm:$0xff]
  %v36 = vld [vmem:[%s0 + $0x8] sm:$0xff]
  %v37 = vld [vmem:[%s0 + $0x10] sm:$0xff]
  %v38 = vld [vmem:[%s0 + $0x18] sm:$0xff]
  %v39 = vld [vmem:[%s0 + $0x20] sm:$0xff]
  %v40 = vld [vmem:[%s0 + $0x28] sm:$0xff]
  %v41 = vld [vmem:[%s0 + $0x30] sm:$0xff]
  %v42 = vld [vmem:[%s0 + $0x38] sm:$0xff]
  %v43 = vld [vmem:[%s0 + $0x40] sm:$0xff]
  %v44 = vld [vmem:[%s0 + $0x48] sm:$0xff]
  %v45 = vld [vmem:[%s0 + $0x50] sm:$0xff]
  %v46 = vld [vmem:[%s0 + $0x58] sm:$0xff]
  %v47 = vld [vmem:[%s0 + $0x60] sm:$0xff]
  %v48 = vld [vmem:[%s0 + $0x68] sm:$0xff]
  %v49 = vld [vmem:[%s0 + $0x70] sm:$0xff]
  %v50 = vld [vmem:[%s0 + $0x78] sm:$0xff]
  %v51 = vld [vmem:[%s1] sm:$0xff]
  %v52 = vld [vmem:[%s1 + $0x8] sm:$0xff]
  %v53 = vld [vmem:[%s1 + $0x10] sm:$0xff]
  %v54 = vld [vmem:[%s1 + $0x18] sm:$0xff]
  %v55 = vld [vmem:[%s1 + $0x20] sm:$0xff]
  %v56 = vld [vmem:[%s1 + $0x28] sm:$0xff]
  %v57 = vld [vmem:[%s1 + $0x30] sm:$0xff]
  %v58 = vld [vmem:[%s1 + $0x38] sm:$0xff]
  %v59 = vpack.c.bf16 %v36, %v35
  %v60 = vpack.c.bf16 %v38, %v37
  %v61 = vpack.c.bf16 %v40, %v39
  %v62 = vpack.c.bf16 %v42, %v41
  %v63 = vpack.c.bf16 %v44, %v43
  %v64 = vpack.c.bf16 %v46, %v45
  %v65 = vpack.c.bf16 %v48, %v47
  %v66 = vpack.c.bf16 %v50, %v49
  %v67 = vpack.c.bf16 %v52, %v51
  %v68 = vpack.c.bf16 %v54, %v53
  %v69 = vpack.c.bf16 %v56, %v55
  %v70 = vpack.c.bf16 %v58, %v57
  %v71 = vld [vmem:[#allocation2] sm:$0xff]
  %v72 = vld [vmem:[#allocation2 + $0x8] sm:$0xff]
  %v73 = vld [vmem:[#allocation2 + $0x10] sm:$0xff]
  %v74 = vld [vmem:[#allocation2 + $0x18] sm:$0xff]
  %v75 = vld [vmem:[#allocation2 + $0x20] sm:$0xff]
  %v76 = vld [vmem:[#allocation2 + $0x28] sm:$0xff]
  %v77 = vld [vmem:[#allocation2 + $0x30] sm:$0xff]
  %v78 = vld [vmem:[#allocation2 + $0x38] sm:$0xff]
  %v79 = vld [vmem:[#allocation2 + $0x40] sm:$0xff]
  %v80 = vld [vmem:[#allocation2 + $0x48] sm:$0xff]
  %v81 = vld [vmem:[#allocation2 + $0x50] sm:$0xff]
  %v82 = vld [vmem:[#allocation2 + $0x58] sm:$0xff]
  %v83 = vld [vmem:[#allocation2 + $0x60] sm:$0xff]
  %v84 = vld [vmem:[#allocation2 + $0x68] sm:$0xff]
  %v85 = vld [vmem:[#allocation2 + $0x70] sm:$0xff]
  %v86 = vld [vmem:[#allocation2 + $0x78] sm:$0xff]
  %vm87 = vcmask 523264
  %v89 = vsel %vm87, %v59, 0
  %v92 = vsel %vm87, %v60, 0
  %v95 = vsel %vm87, %v61, 0
  %v98 = vsel %vm87, %v62, 0
  %v101 = vsel %vm87, %v63, 0
  %v104 = vsel %vm87, %v64, 0
  %v107 = vsel %vm87, %v65, 0
  %v110 = vsel %vm87, %v66, 0
  %112 = vmatprep.subr.bf16.mxu0 0
  %113 = vmatpush1.bf16.msra.mxu0 0
  %114 = vmatprep.subr.bf16.mxu0 0
  %115 = vmatpush1.bf16.msra.mxu0 0
  %116 = vmatprep.subr.bf16.mxu0 0
  %117 = vmatpush1.bf16.msra.mxu0 0
  %118 = vmatprep.subr.bf16.mxu0 0
  %119 = vmatpush1.bf16.msra.mxu0 0
  %120 = vmatprep.subr.bf16.mxu0 0
  %121 = vmatpush1.bf16.msra.mxu0 %v70
  %122 = vmatprep.subr.bf16.mxu0 0
  %123 = vmatpush1.bf16.msra.mxu0 %v69
  %124 = vmatprep.subr.bf16.mxu0 0
  %125 = vmatpush1.bf16.msra.mxu0 %v68
  %126 = vmatprep.subr.bf16.mxu0 0
  %127 = vmatpush1.bf16.msra.mxu0 %v67
  %128 = vmatprep.subr.bf16.mxu0 0
  %129 = vmatpush2.bf16.msra.mxu0 0
  %130 = vmatprep.subr.bf16.mxu0 0
  %131 = vmatpush2.bf16.msra.mxu0 0
  %132 = vmatprep.subr.bf16.mxu0 0
  %133 = vmatpush2.bf16.msra.mxu0 0
  %134 = vmatprep.subr.bf16.mxu0 0
  %135 = vmatpush2.bf16.msra.mxu0 0
  %136 = vmatprep.subr.bf16.mxu0 0
  %137 = vmatpush2.bf16.msra.mxu0 0
  %138 = vmatprep.subr.bf16.mxu0 0
  %139 = vmatpush2.bf16.msra.mxu0 0
  %140 = vmatprep.subr.bf16.mxu0 0
  %141 = vmatpush2.bf16.msra.mxu0 0
  %142 = vmatprep.subr.bf16.mxu0 0
  %143 = vmatpush2.bf16.msra.mxu0 0
  %144 = vmatprep.mubr.bf16.mxu0 0
  %145 = vmatmul.mubr.bf16.gmra.mxu0 %v89
  %v146 = vpop.f32.mrf.mxu0
  %v147 = vadd.f32 0.0, %v146
  %v148 = vpop.f32.mrf.mxu0
  %v149 = vpop.f32.mrf.mxu0
  %v150 = vadd.f32 0.0, %v149
  %v151 = vpop.f32.mrf.mxu0
  %152 = vmatprep.mubr.bf16.mxu0 0
  %153 = vmatmul.mubr.bf16.gmra.mxu0 %v92
  %v154 = vpop.f32.mrf.mxu0
  %v155 = vadd.f32 0.0, %v154
  %v156 = vpop.f32.mrf.mxu0
  %v157 = vpop.f32.mrf.mxu0
  %v158 = vadd.f32 0.0, %v157
  %v159 = vpop.f32.mrf.mxu0
  %160 = vmatprep.mubr.bf16.mxu0 0
  %161 = vmatmul.mubr.bf16.gmra.mxu0 %v95
  %v162 = vpop.f32.mrf.mxu0
  %v163 = vadd.f32 0.0, %v162
  %v164 = vpop.f32.mrf.mxu0
  %v165 = vpop.f32.mrf.mxu0
  %v166 = vadd.f32 0.0, %v165
  %v167 = vpop.f32.mrf.mxu0
  %168 = vmatprep.mubr.bf16.mxu0 0
  %169 = vmatmul.mubr.bf16.gmra.mxu0 %v98
  %v170 = vpop.f32.mrf.mxu0
  %v171 = vadd.f32 0.0, %v170
  %v172 = vpop.f32.mrf.mxu0
  %v173 = vpop.f32.mrf.mxu0
  %v174 = vadd.f32 0.0, %v173
  %v175 = vpop.f32.mrf.mxu0
  %176 = vmatprep.mubr.bf16.mxu0 0
  %177 = vmatmul.mubr.bf16.gmra.mxu0 %v101
  %v178 = vpop.f32.mrf.mxu0
  %v179 = vadd.f32 0.0, %v178
  %v180 = vpop.f32.mrf.mxu0
  %v181 = vpop.f32.mrf.mxu0
  %v182 = vadd.f32 0.0, %v181
  %v183 = vpop.f32.mrf.mxu0
  %184 = vmatprep.mubr.bf16.mxu0 0
  %185 = vmatmul.mubr.bf16.gmra.mxu0 %v104
  %v186 = vpop.f32.mrf.mxu0
  %v187 = vadd.f32 0.0, %v186
  %v188 = vpop.f32.mrf.mxu0
  %v189 = vpop.f32.mrf.mxu0
  %v190 = vadd.f32 0.0, %v189
  %v191 = vpop.f32.mrf.mxu0
  %192 = vmatprep.mubr.bf16.mxu0 0
  %193 = vmatmul.mubr.bf16.gmra.mxu0 %v107
  %v194 = vpop.f32.mrf.mxu0
  %v195 = vadd.f32 0.0, %v194
  %v196 = vpop.f32.mrf.mxu0
  %v197 = vpop.f32.mrf.mxu0
  %v198 = vadd.f32 0.0, %v197
  %v199 = vpop.f32.mrf.mxu0
  %200 = vmatprep.mubr.bf16.mxu0 0
  %201 = vmatmul.mubr.bf16.gmra.mxu0 %v110
  %v202 = vpop.f32.mrf.mxu0
  %v203 = vadd.f32 0.0, %v202
  %v204 = vpop.f32.mrf.mxu0
  %v205 = vpop.f32.mrf.mxu0
  %v206 = vadd.f32 0.0, %v205
  %v207 = vpop.f32.mrf.mxu0
  %208 = vdwg.mxu0
  %v209 = vadd.f32 %v71, %v147
  %v210 = vadd.f32 %v72, %v150
  %v211 = vadd.f32 %v73, %v155
  %v212 = vadd.f32 %v74, %v158
  %v213 = vadd.f32 %v75, %v163
  %v214 = vadd.f32 %v76, %v166
  %v215 = vadd.f32 %v77, %v171
  %v216 = vadd.f32 %v78, %v174
  %v217 = vadd.f32 %v79, %v179
  %v218 = vadd.f32 %v80, %v182
  %v219 = vadd.f32 %v81, %v187
  %v220 = vadd.f32 %v82, %v190
  %v221 = vadd.f32 %v83, %v195
  %v222 = vadd.f32 %v84, %v198
  %v223 = vadd.f32 %v85, %v203
  %v224 = vadd.f32 %v86, %v206
  %225 = vst [vmem:[#allocation2] sm:$0xff] %v209
  %226 = vst [vmem:[#allocation2 + $0x8] sm:$0xff] %v210
  %227 = vst [vmem:[#allocation2 + $0x10] sm:$0xff] %v211
  %228 = vst [vmem:[#allocation2 + $0x18] sm:$0xff] %v212
  %229 = vst [vmem:[#allocation2 + $0x20] sm:$0xff] %v213
  %230 = vst [vmem:[#allocation2 + $0x28] sm:$0xff] %v214
  %231 = vst [vmem:[#allocation2 + $0x30] sm:$0xff] %v215
  %232 = vst [vmem:[#allocation2 + $0x38] sm:$0xff] %v216
  %233 = vst [vmem:[#allocation2 + $0x40] sm:$0xff] %v217
  %234 = vst [vmem:[#allocation2 + $0x48] sm:$0xff] %v218
  %235 = vst [vmem:[#allocation2 + $0x50] sm:$0xff] %v219
  %236 = vst [vmem:[#allocation2 + $0x58] sm:$0xff] %v220
  %237 = vst [vmem:[#allocation2 + $0x60] sm:$0xff] %v221
  %238 = vst [vmem:[#allocation2 + $0x68] sm:$0xff] %v222
  %239 = vst [vmem:[#allocation2 + $0x70] sm:$0xff] %v223
  %240 = vst [vmem:[#allocation2 + $0x78] sm:$0xff] %v224
  // Predicated region
  $region18: #{graph_convolution.2} parent=0 // pred_check
    %p241 = pneg %p15
  $region19: #{graph_convolution.2} parent=0 // pred_check_branch
    %243 = sbr.rel (%p241) target = $region21
  $region20: #{graph_convolution.2} parent=0 // pred_region
    %v244 = vld [vmem:[#allocation2] sm:$0xff]
    %v245 = vld [vmem:[#allocation2 + $0x8] sm:$0xff]
    %v246 = vld [vmem:[#allocation2 + $0x10] sm:$0xff]
    %v247 = vld [vmem:[#allocation2 + $0x18] sm:$0xff]
    %v248 = vld [vmem:[#allocation2 + $0x20] sm:$0xff]
    %v249 = vld [vmem:[#allocation2 + $0x28] sm:$0xff]
    %v250 = vld [vmem:[#allocation2 + $0x30] sm:$0xff]
    %v251 = vld [vmem:[#allocation2 + $0x38] sm:$0xff]
    %v252 = vld [vmem:[#allocation2 + $0x40] sm:$0xff]
    %v253 = vld [vmem:[#allocation2 + $0x48] sm:$0xff]
    %v254 = vld [vmem:[#allocation2 + $0x50] sm:$0xff]
    %v255 = vld [vmem:[#allocation2 + $0x58] sm:$0xff]
    %v256 = vld [vmem:[#allocation2 + $0x60] sm:$0xff]
    %v257 = vld [vmem:[#allocation2 + $0x68] sm:$0xff]
    %v258 = vld [vmem:[#allocation2 + $0x70] sm:$0xff]
    %v259 = vld [vmem:[#allocation2 + $0x78] sm:$0xff]
    %v260 = vld [vmem:[%s2] sm:$0x1]
    %v262 = vlaneseq
    %v263 = vshrl.u32 %v262, 7
    %v264 = vsub.s32 0, %v263
    %v265 = vrot.slane %v260, %v264
    %v267 = vadd.f32 %v244, %v265
    %v268 = vadd.f32 %v245, %v265
    %v269 = vadd.f32 %v246, %v265
    %v270 = vadd.f32 %v247, %v265
    %v271 = vadd.f32 %v248, %v265
    %v272 = vadd.f32 %v249, %v265
    %v273 = vadd.f32 %v250, %v265
    %v274 = vadd.f32 %v251, %v265
    %v275 = vadd.f32 %v252, %v265
    %v276 = vadd.f32 %v253, %v265
    %v277 = vadd.f32 %v254, %v265
    %v278 = vadd.f32 %v255, %v265
    %v279 = vadd.f32 %v256, %v265
    %v280 = vadd.f32 %v257, %v265
    %v281 = vadd.f32 %v258, %v265
    %v282 = vadd.f32 %v259, %v265
    %283 = vst [vmem:[%s3] sm:$0xff] %v267
    %284 = vst [vmem:[%s3 + $0x8] sm:$0xff] %v268
    %285 = vst [vmem:[%s3 + $0x10] sm:$0xff] %v269
    %286 = vst [vmem:[%s3 + $0x18] sm:$0xff] %v270
    %287 = vst [vmem:[%s3 + $0x20] sm:$0xff] %v271
    %288 = vst [vmem:[%s3 + $0x28] sm:$0xff] %v272
    %289 = vst [vmem:[%s3 + $0x30] sm:$0xff] %v273
    %290 = vst [vmem:[%s3 + $0x38] sm:$0xff] %v274
    %291 = vst [vmem:[%s3 + $0x40] sm:$0xff] %v275
    %292 = vst [vmem:[%s3 + $0x48] sm:$0xff] %v276
    %293 = vst [vmem:[%s3 + $0x50] sm:$0xff] %v277
    %294 = vst [vmem:[%s3 + $0x58] sm:$0xff] %v278
    %295 = vst [vmem:[%s3 + $0x60] sm:$0xff] %v279
    %296 = vst [vmem:[%s3 + $0x68] sm:$0xff] %v280
    %297 = vst [vmem:[%s3 + $0x70] sm:$0xff] %v281
    %298 = vst [vmem:[%s3 + $0x78] sm:$0xff] %v282
  $region21: #{graph_convolution.2} parent=0 // pred_fallthru
    _
  // Predicated region
  $region22: #{graph_convolution.2} parent=0 // pred_check
    _
  $region23: #{graph_convolution.2} parent=0 // pred_check_branch
    %300 = sbr.rel (0) target = $region25
  $region24: #{graph_convolution.2} parent=0 // pred_region
    _
  $region25: #{graph_convolution.2} parent=0 // pred_fallthru
    _
  // Predicated region
  $region26: #{graph_convolution.2} parent=0 // pred_check
    _
  $region27: #{graph_convolution.2} parent=0 // pred_check_branch
    %302 = sbr.rel (0) target = $region29
  $region28: #{graph_convolution.2} parent=0 // pred_region
    _
  $region29: #{graph_convolution.2} parent=0 // pred_fallthru
    _

</llo_original>
